<compile_context>
chip_gen: v7x
topology: tpu7x:2x2x1
jax: 0.10.0
libtpu: 0.0.40
codegen_flags: <defaults>
</compile_context>

<pallas_src>
import functools
import math
import numpy as np
import jax
import jax.numpy as jnp
from jax.experimental import pallas as pl
from jax.experimental.pallas import tpu as pltpu

NUM_CHANNEL = 3
NUM_FEAT = 120
LANE = 128

# Feature-selection index list copied verbatim from the PyTorch module.
FEAT_IDX = np.array([
    557, 581, 553, 551, 92, 554, 579, 570, 573, 577, 565, 286, 555, 549, 13, 550,
    63, 580, 556, 564, 0, 576, 567, 552, 578, 588, 597, 566, 571, 44, 572, 574,
    14, 582, 381, 594, 4, 593, 218, 25, 84, 592, 3, 591, 547, 561, 562, 548, 319,
    596, 558, 563, 87, 65, 599, 17, 88, 2, 49, 309, 6, 81, 15, 590, 589, 43, 273,
    420, 546, 568, 400, 277, 202, 287, 434, 435, 423, 431, 301, 417, 412, 205,
    179, 327, 176, 442, 172, 450, 391, 163, 154, 480, 485, 490, 491, 498, 503,
    507, 509, 452, 239, 388, 219, 303, 292, 310, 316, 320, 322, 324, 326, 330,
    336, 263, 262, 339, 340, 256, 345, 347], dtype=np.int32)


def _round_up(n, m):
    return (n + m - 1) // m * m


def _hdc_rbf_kernel(accel_ref, w1_ref, feat_ref, w2_ref, av_ref, out_ref):
    # Bias is folded into the weights via the constant-1 K lane, so the MXU output is
    # already q = 2p + b. Using cos(p+b)*sin(p) = 0.5*(sin(2p+b) - sin(b)) and
    # a = 2 - sin(b):   combined > 0  <=>  (sin(q1)+a1)*(sin(q2)+a2) > 4.
    q1 = jnp.dot(accel_ref[...], w1_ref[...], preferred_element_type=jnp.float32)
    q2 = jnp.dot(feat_ref[...], w2_ref[...], preferred_element_type=jnp.float32)
    av = av_ref[...]
    g1 = jnp.sin(q1) + av[0:1, :]
    g2 = jnp.sin(q2) + av[1:2, :]
    out_ref[...] = jnp.where(g1 * g2 > 4.0, 1.0, -1.0).astype(out_ref.dtype)


def prepare_hdc_rbf_params(w1, b1, w2, b2, *, timestamps, out_dim):
    """One-time parameter prep (hoisted out of the per-call path).

    Returns (w1_ext, w2_ext, av):
      w1_ext: (k1_ext, out_dim)  rows 0..k1-1 = 2*W1, row k1 = b1, rest zero.
      w2_ext: (k2_ext, out_dim)  rows 0..119  = 2*W2, row 120 = b2, rest zero.
      av:     (2, out_dim)       [2 - sin(b1); 2 - sin(b2)].
    """
    k1 = NUM_CHANNEL * timestamps
    # +1 guarantees a genuinely zero-padded lane exists for the constant-1 bias lane,
    # even if k1 were ever an exact multiple of 128.
    k1_ext = _round_up(k1 + 1, LANE)
    k2_ext = _round_up(NUM_FEAT + 1, LANE)

    w1 = jnp.asarray(w1, jnp.float32)
    w2 = jnp.asarray(w2, jnp.float32)
    b1 = jnp.asarray(b1, jnp.float32).reshape(1, out_dim)
    b2 = jnp.asarray(b2, jnp.float32).reshape(1, out_dim)

    w1_ext = jnp.zeros((k1_ext, out_dim), jnp.float32)
    w1_ext = w1_ext.at[:k1].set(2.0 * w1).at[k1].set(b1[0])
    w2_ext = jnp.zeros((k2_ext, out_dim), jnp.float32)
    w2_ext = w2_ext.at[:NUM_FEAT].set(2.0 * w2).at[NUM_FEAT].set(b2[0])

    av = jnp.concatenate([2.0 - jnp.sin(b1), 2.0 - jnp.sin(b2)], axis=0)  # (2, out_dim)
    return w1_ext, w2_ext, av


@functools.partial(jax.jit, static_argnames=("timestamps", "out_dim", "tile_d"))
def hdc_rbf_encode_batch(inp, feat, w1_ext, w2_ext, av, *,
                         timestamps, out_dim, tile_d=None):
    """Encode a batch of windows. inp: (B, window, 4), feat: (B, >=600) -> (B, out_dim)."""
    B, window, _ = inp.shape
    k1 = NUM_CHANNEL * timestamps
    k1_ext = w1_ext.shape[0]
    k2_ext = w2_ext.shape[0]

    # Per-window signal padding + channel-major concat: [x_0..x_{T-1}, y_..., z_...].
    sig = inp[:, :, 1:4].astype(jnp.float32)                      # (B, window, 3)
    if window < timestamps:
        sig = jnp.pad(sig, ((0, 0), (0, timestamps - window), (0, 0)))
    accel = jnp.transpose(sig, (0, 2, 1)).reshape(B, k1)          # (B, 3*timestamps)

    ones = jnp.ones((B, 1), jnp.float32)                          # constant-1 bias lane
    accel = jnp.concatenate(
        [accel, ones, jnp.zeros((B, k1_ext - k1 - 1), jnp.float32)], axis=1)

    feat_sel = feat[:, FEAT_IDX].astype(jnp.float32)              # (B, 120)
    feat_sel = jnp.concatenate(
        [feat_sel, ones, jnp.zeros((B, k2_ext - NUM_FEAT - 1), jnp.float32)], axis=1)

    if tile_d is None:
        tile_d = out_dim          # single full-width, lane-dense tile (no grid overhead)
        # TODO(synk): on v7x, tile_d = out_dim // 2 shards D across the 2 TensorCores.
    assert out_dim % tile_d == 0 and tile_d % LANE == 0
    grid = (out_dim // tile_d,)

    out = pl.pallas_call(
        _hdc_rbf_kernel,
        out_shape=jax.ShapeDtypeStruct((B, out_dim), jnp.float32),
        grid_spec=pltpu.PrefetchScalarGridSpec(
            num_scalar_prefetch=0,
            grid=grid,
            in_specs=[
                pl.BlockSpec((B, k1_ext), lambda j: (0, 0)),        # accel (+ bias lane)
                pl.BlockSpec((k1_ext, tile_d), lambda j: (0, j)),   # 2*W1 with b1 row
                pl.BlockSpec((B, k2_ext), lambda j: (0, 0)),        # feats (+ bias lane)
                pl.BlockSpec((k2_ext, tile_d), lambda j: (0, j)),   # 2*W2 with b2 row
                pl.BlockSpec((2, tile_d), lambda j: (0, j)),        # [a1; a2] = 2 - sin(b)
            ],
            out_specs=pl.BlockSpec((B, tile_d), lambda j: (0, j)),
        ),
        compiler_params=pltpu.CompilerParams(
            dimension_semantics=("parallel",)),
    )(accel, w1_ext, feat_sel, w2_ext, av)
    return out


def hdc_rbf_encode(inp, feat, w1_ext, w2_ext, av, *, timestamps, out_dim, tile_d=None):
    """Single-window forward, mirroring the PyTorch module API. Returns (out_dim,)."""
    out = hdc_rbf_encode_batch(inp[None], feat[None], w1_ext, w2_ext, av,
                               timestamps=timestamps, out_dim=out_dim, tile_d=tile_d)
    return out.reshape(-1)


def _reference_combined_np(inp, feat, w1, b1, w2, b2, *, timestamps):
    """float64 numpy reference of the pre-quantization `combined` value (original form)."""
    inp = np.asarray(inp, np.float64)
    feat = np.asarray(feat, np.float64)
    w1 = np.asarray(w1, np.float64)
    b1 = np.asarray(b1, np.float64).reshape(-1)
    w2 = np.asarray(w2, np.float64)
    b2 = np.asarray(b2, np.float64).reshape(-1)
    window = inp.shape[0]
    x = np.zeros(timestamps); y = np.zeros(timestamps); z = np.zeros(timestamps)
    x[:window] = inp[:, 1]; y[:window] = inp[:, 2]; z[:window] = inp[:, 3]
    accel = np.concatenate([x, y, z])
    p1 = accel @ w1
    s = np.cos(p1 + b1) * np.sin(p1)
    p2 = feat[FEAT_IDX] @ w2
    f = np.cos(p2 + b2) * np.sin(p2)
    return s + f + s * f


if __name__ == "__main__":
    timestamps = 32
    out_dim = 512
    window = 28       # < timestamps, exercises the zero-padding branch
    batch = 8         # batched windows fill vreg sublanes / amortize weight streaming

    key = jax.random.PRNGKey(0)
    k1, k2, k3, k4, k5, k6 = jax.random.split(key, 6)

    # input is (window, 4): col 0 unused / timestamp, cols 1..3 = x,y,z accel
    inp = jax.random.normal(k1, (batch, window, 4), jnp.float32)
    feat = jax.random.normal(k2, (batch, 600), jnp.float32)   # max gather index is 599

    # Synthetic parameters (torchhd Sinusoid init: weight ~ N(0,1), bias ~ U(0, 2pi))
    w1 = jax.random.normal(k3, (NUM_CHANNEL * timestamps, out_dim), jnp.float32)
    b1 = jax.random.uniform(k4, (1, out_dim), jnp.float32, 0.0, 2.0 * math.pi)
    w2 = jax.random.normal(k5, (NUM_FEAT, out_dim), jnp.float32)
    b2 = jax.random.uniform(k6, (1, out_dim), jnp.float32, 0.0, 2.0 * math.pi)

    # One-time parameter preparation (hoisted out of the per-call path).
    w1_ext, w2_ext, av = prepare_hdc_rbf_params(
        w1, b1, w2, b2, timestamps=timestamps, out_dim=out_dim)
    w1_ext, w2_ext, av = jax.block_until_ready((w1_ext, w2_ext, av))

    # Batched forward (B windows at once).
    out_b = hdc_rbf_encode_batch(inp, feat, w1_ext, w2_ext, av,
                                 timestamps=timestamps, out_dim=out_dim)
    out_b = jax.block_until_ready(out_b)
    assert out_b.shape == (batch, out_dim)

    # Single-window forward (exact PyTorch module API: one window per call).
    out_single = hdc_rbf_encode(inp[0], feat[0], w1_ext, w2_ext, av,
                                timestamps=timestamps, out_dim=out_dim)
    out_single = jax.block_until_ready(out_single)
    assert out_single.shape == (out_dim,)

    # Correctness check against a float64 numpy reference of the original formulation.
    # Signs are compared only where |combined| is clearly away from 0, since f32 rounding
    # (and the missing f64 path on TPU) can legally flip boundary cases.
    out_np = np.asarray(out_b)
    for b in range(batch):
        comb_ref = _reference_combined_np(inp[b], feat[b], w1, b1, w2, b2,
                                          timestamps=timestamps)
        ref_sign = np.where(comb_ref > 0, 1.0, -1.0)
        mask = np.abs(comb_ref) > 1e-3
        np.testing.assert_array_equal(out_np[b][mask], ref_sign[mask])
        if b == 0:
            np.testing.assert_array_equal(np.asarray(out_single)[mask], ref_sign[mask])
    assert set(np.unique(out_np)) <= {-1.0, 1.0}

    print("KERNEL_OK")
</pallas_src>

<mosaic_0001>
module attributes {stable_mosaic.version = 11 : i64} {
  func.func @_hdc_rbf_kernel(%arg0: i32, %arg1: memref<8x128xf32, #tpu.memory_space<vmem>>, %arg2: memref<128x512xf32, #tpu.memory_space<vmem>>, %arg3: memref<8x128xf32, #tpu.memory_space<vmem>>, %arg4: memref<128x512xf32, #tpu.memory_space<vmem>>, %arg5: memref<2x512xf32, #tpu.memory_space<vmem>>, %arg6: memref<8x512xf32, #tpu.memory_space<vmem>>) attributes {dimension_semantics = [#tpu.dimension_semantics<parallel>], iteration_bounds = array<i64: 1>, scalar_prefetch = 0 : i64, scratch_operands = 0 : i64, tpu.core_type = #tpu.core_type<tc>, window_params = [{pipeline_mode = #tpu.pipeline_mode<synchronous>, transform_indices = @transform_0, window_bounds = array<i64: 8, 128>}, {transform_indices = @transform_1, window_bounds = array<i64: 128, 512>}, {pipeline_mode = #tpu.pipeline_mode<synchronous>, transform_indices = @transform_2, window_bounds = array<i64: 8, 128>}, {transform_indices = @transform_3, window_bounds = array<i64: 128, 512>}, {transform_indices = @transform_4, window_bounds = array<i64: 2, 512>}, {transform_indices = @transform_5, window_bounds = array<i64: 8, 512>}]} {
    %c0 = arith.constant 0 : index
    %c0_0 = arith.constant 0 : index
    %0 = vector.load %arg1[%c0, %c0_0] : memref<8x128xf32, #tpu.memory_space<vmem>>, vector<8x128xf32>
    %c0_1 = arith.constant 0 : index
    %c0_2 = arith.constant 0 : index
    %1 = vector.load %arg2[%c0_1, %c0_2] : memref<128x512xf32, #tpu.memory_space<vmem>>, vector<128x512xf32>
    %cst = arith.constant dense<0.000000e+00> : vector<8x512xf32>
    %2 = tpu.matmul %0, %1, %cst {dimension_numbers = #tpu.dot_dimension_numbers<[1], [0], [0], [1], [0, 0, 1, 1], [], []>} : vector<8x128xf32>, vector<128x512xf32>, vector<8x512xf32> -> vector<8x512xf32>
    %c0_3 = arith.constant 0 : index
    %c0_4 = arith.constant 0 : index
    %3 = vector.load %arg3[%c0_3, %c0_4] : memref<8x128xf32, #tpu.memory_space<vmem>>, vector<8x128xf32>
    %c0_5 = arith.constant 0 : index
    %c0_6 = arith.constant 0 : index
    %4 = vector.load %arg4[%c0_5, %c0_6] : memref<128x512xf32, #tpu.memory_space<vmem>>, vector<128x512xf32>
    %cst_7 = arith.constant dense<0.000000e+00> : vector<8x512xf32>
    %5 = tpu.matmul %3, %4, %cst_7 {dimension_numbers = #tpu.dot_dimension_numbers<[1], [0], [0], [1], [0, 0, 1, 1], [], []>} : vector<8x128xf32>, vector<128x512xf32>, vector<8x512xf32> -> vector<8x512xf32>
    %c0_8 = arith.constant 0 : index
    %c0_9 = arith.constant 0 : index
    %6 = vector.load %arg5[%c0_8, %c0_9] : memref<2x512xf32, #tpu.memory_space<vmem>>, vector<2x512xf32>
    %7 = math.sin %2 : vector<8x512xf32>
    %8 = vector.extract_strided_slice %6 {offsets = [0, 0], sizes = [1, 512], strides = [1, 1]} : vector<2x512xf32> to vector<1x512xf32>
    %9 = vector.broadcast %8 : vector<1x512xf32> to vector<8x512xf32>
    %10 = arith.addf %7, %9 : vector<8x512xf32>
    %11 = math.sin %5 : vector<8x512xf32>
    %12 = vector.extract_strided_slice %6 {offsets = [1, 0], sizes = [1, 512], strides = [1, 1]} : vector<2x512xf32> to vector<1x512xf32>
    %13 = vector.broadcast %12 : vector<1x512xf32> to vector<8x512xf32>
    %14 = arith.addf %11, %13 : vector<8x512xf32>
    %15 = arith.mulf %10, %14 : vector<8x512xf32>
    %cst_10 = arith.constant 4.000000e+00 : f32
    %16 = vector.broadcast %cst_10 : f32 to vector<8x512xf32>
    %17 = arith.cmpf ogt, %15, %16 : vector<8x512xf32>
    %cst_11 = arith.constant 1.000000e+00 : f32
    %cst_12 = arith.constant -1.000000e+00 : f32
    %18 = vector.broadcast %cst_11 : f32 to vector<8x512xf32>
    %19 = vector.broadcast %cst_12 : f32 to vector<8x512xf32>
    %20 = arith.select %17, %18, %19 : vector<8x512xi1>, vector<8x512xf32>
    %c0_13 = arith.constant 0 : index
    %c0_14 = arith.constant 0 : index
    %21 = vector.load %arg6[%c0_13, %c0_14] : memref<8x512xf32, #tpu.memory_space<vmem>>, vector<8x512xf32>
    tpu.vector_store %arg6[%c0_13, %c0_14], %20 {strides = array<i32>} : memref<8x512xf32, #tpu.memory_space<vmem>>, vector<8x512xf32>,
    return
  }
  func.func @transform_0(%arg0: i32) -> (i32, i32) {
    %c0_i32 = arith.constant 0 : i32
    %c0_i32_0 = arith.constant 0 : i32
    %c0_i32_1 = arith.constant 0 : i32
    return %c0_i32, %c0_i32_0 : i32, i32
  }
  func.func @transform_1(%arg0: i32) -> (i32, i32) {
    %c0_i32 = arith.constant 0 : i32
    %c0_i32_0 = arith.constant 0 : i32
    return %c0_i32, %arg0 : i32, i32
  }
  func.func @transform_2(%arg0: i32) -> (i32, i32) {
    %c0_i32 = arith.constant 0 : i32
    %c0_i32_0 = arith.constant 0 : i32
    %c0_i32_1 = arith.constant 0 : i32
    return %c0_i32, %c0_i32_0 : i32, i32
  }
  func.func @transform_3(%arg0: i32) -> (i32, i32) {
    %c0_i32 = arith.constant 0 : i32
    %c0_i32_0 = arith.constant 0 : i32
    return %c0_i32, %arg0 : i32, i32
  }
  func.func @transform_4(%arg0: i32) -> (i32, i32) {
    %c0_i32 = arith.constant 0 : i32
    %c0_i32_0 = arith.constant 0 : i32
    return %c0_i32, %arg0 : i32, i32
  }
  func.func @transform_5(%arg0: i32) -> (i32, i32) {
    %c0_i32 = arith.constant 0 : i32
    %c0_i32_0 = arith.constant 0 : i32
    return %c0_i32, %arg0 : i32, i32
  }
}

</mosaic_0001>

<llo_original>
// kernel: hdc_rbf_encode_batch.1
$region0: #{hdc_rbf_encode_batch.1}
  #allocation0 [shape = 'u32[]', space=smem, size = 0x4, offset = 0x4, fixed_abs, tag = 'smem constant byte address 0x4 - core index']
  #allocation1 [shape = 'u32[144,128]{1,0:T(1,128)}', space=vmem, size = 0x12000, scoped, tag = 'internal scratch']
  %s0 = inlined_call_operand.vmem [shape: f32[8,128], index: 0, kind: input, shape index: {}]
  %s1 = inlined_call_operand.vmem [shape: f32[128,512], index: 1, kind: input, shape index: {}]
  %s2 = inlined_call_operand.vmem [shape: f32[8,128], index: 2, kind: input, shape index: {}]
  %s3 = inlined_call_operand.vmem [shape: f32[128,512], index: 3, kind: input, shape index: {}]
  %s4 = inlined_call_operand.vmem [shape: f32[2,512], index: 4, kind: input, shape index: {}]
  %s5 = inlined_call_operand.hbm [shape: f32[8,512], index: 5, kind: output, shape index: {}]
  %s6 = sld [smem:[#allocation0]]
  $region30: #{hdc_rbf_encode_batch.1} parent=0
    _
  %s8 = ssub.s32 1, %s6
  %s9 = scalar_select 0, %s8, %s6
  $region1: #{hdc_rbf_encode_batch.1} parent=0
    #allocation2 [shape = 'u8[16384]{0}', space=vmem, size = 0x4000, scoped, tag = 'output window, operand 0, single buffered']
    #allocation3 [shape = 's32[1]{0}', space=sflag, size = 0x4, scoped, tag = 'scoped memory for hdc_rbf_encode_batch.1']
    %10 = vsyncpa [#allocation3], 0
    // Predicated region
    $region2: #{hdc_rbf_encode_batch.1} parent=1 // pred_check
      _
    $region3: #{hdc_rbf_encode_batch.1} parent=1 // pred_check_branch
      %12 = sbr.rel (0) target = $region5
    $region4: #{hdc_rbf_encode_batch.1} parent=1 // pred_region
      _
    $region5: #{hdc_rbf_encode_batch.1} parent=1 // pred_fallthru
      _
    // Predicated region
    $region6: #{hdc_rbf_encode_batch.1} parent=1 // pred_check
      _
    $region7: #{hdc_rbf_encode_batch.1} parent=1 // pred_check_branch
      %14 = sbr.rel (0) target = $region9
    $region8: #{hdc_rbf_encode_batch.1} parent=1 // pred_region
      _
    $region9: #{hdc_rbf_encode_batch.1} parent=1 // pred_fallthru
      _
    // Predicated region
    $region10: #{hdc_rbf_encode_batch.1} parent=1 // pred_check
      _
    $region11: #{hdc_rbf_encode_batch.1} parent=1 // pred_check_branch
      %16 = sbr.rel (0) target = $region13
    $region12: #{hdc_rbf_encode_batch.1} parent=1 // pred_region
      _
    $region13: #{hdc_rbf_encode_batch.1} parent=1 // pred_fallthru
      _
    // Predicated region
    $region14: #{hdc_rbf_encode_batch.1} parent=1 // pred_check
      _
    $region15: #{hdc_rbf_encode_batch.1} parent=1 // pred_check_branch
      %18 = sbr.rel (0) target = $region17
    $region16: #{hdc_rbf_encode_batch.1} parent=1 // pred_region
      _
    $region17: #{hdc_rbf_encode_batch.1} parent=1 // pred_fallthru
      _
    // Predicated region
    $region18: #{hdc_rbf_encode_batch.1} parent=1 // pred_check
      _
    $region19: #{hdc_rbf_encode_batch.1} parent=1 // pred_check_branch
      %20 = sbr.rel (0) target = $region21
    $region20: #{hdc_rbf_encode_batch.1} parent=1 // pred_region
      _
    $region21: #{hdc_rbf_encode_batch.1} parent=1 // pred_fallthru
      _
    %v21 = vld [vmem:[%s0] sm:$0xff]
    %v22 = vld [vmem:[%s1] sm:$0xff]
    %v23 = vld [vmem:[%s1 + $0x8] sm:$0xff]
    %v24 = vld [vmem:[%s1 + $0x10] sm:$0xff]
    %v25 = vld [vmem:[%s1 + $0x18] sm:$0xff]
    %v26 = vld [vmem:[%s1 + $0x20] sm:$0xff]
    %v27 = vld [vmem:[%s1 + $0x28] sm:$0xff]
    %v28 = vld [vmem:[%s1 + $0x30] sm:$0xff]
    %v29 = vld [vmem:[%s1 + $0x38] sm:$0xff]
    %v30 = vld [vmem:[%s1 + $0x40] sm:$0xff]
    %v31 = vld [vmem:[%s1 + $0x48] sm:$0xff]
    %v32 = vld [vmem:[%s1 + $0x50] sm:$0xff]
    %v33 = vld [vmem:[%s1 + $0x58] sm:$0xff]
    %v34 = vld [vmem:[%s1 + $0x60] sm:$0xff]
    %v35 = vld [vmem:[%s1 + $0x68] sm:$0xff]
    %v36 = vld [vmem:[%s1 + $0x70] sm:$0xff]
    %v37 = vld [vmem:[%s1 + $0x78] sm:$0xff]
    %v38 = vld [vmem:[%s1 + $0x80] sm:$0xff]
    %v39 = vld [vmem:[%s1 + $0x88] sm:$0xff]
    %v40 = vld [vmem:[%s1 + $0x90] sm:$0xff]
    %v41 = vld [vmem:[%s1 + $0x98] sm:$0xff]
    %v42 = vld [vmem:[%s1 + $0xa0] sm:$0xff]
    %v43 = vld [vmem:[%s1 + $0xa8] sm:$0xff]
    %v44 = vld [vmem:[%s1 + $0xb0] sm:$0xff]
    %v45 = vld [vmem:[%s1 + $0xb8] sm:$0xff]
    %v46 = vld [vmem:[%s1 + $0xc0] sm:$0xff]
    %v47 = vld [vmem:[%s1 + $0xc8] sm:$0xff]
    %v48 = vld [vmem:[%s1 + $0xd0] sm:$0xff]
    %v49 = vld [vmem:[%s1 + $0xd8] sm:$0xff]
    %v50 = vld [vmem:[%s1 + $0xe0] sm:$0xff]
    %v51 = vld [vmem:[%s1 + $0xe8] sm:$0xff]
    %v52 = vld [vmem:[%s1 + $0xf0] sm:$0xff]
    %v53 = vld [vmem:[%s1 + $0xf8] sm:$0xff]
    %v54 = vld [vmem:[%s1 + $0x100] sm:$0xff]
    %v55 = vld [vmem:[%s1 + $0x108] sm:$0xff]
    %v56 = vld [vmem:[%s1 + $0x110] sm:$0xff]
    %v57 = vld [vmem:[%s1 + $0x118] sm:$0xff]
    %v58 = vld [vmem:[%s1 + $0x120] sm:$0xff]
    %v59 = vld [vmem:[%s1 + $0x128] sm:$0xff]
    %v60 = vld [vmem:[%s1 + $0x130] sm:$0xff]
    %v61 = vld [vmem:[%s1 + $0x138] sm:$0xff]
    %v62 = vld [vmem:[%s1 + $0x140] sm:$0xff]
    %v63 = vld [vmem:[%s1 + $0x148] sm:$0xff]
    %v64 = vld [vmem:[%s1 + $0x150] sm:$0xff]
    %v65 = vld [vmem:[%s1 + $0x158] sm:$0xff]
    %v66 = vld [vmem:[%s1 + $0x160] sm:$0xff]
    %v67 = vld [vmem:[%s1 + $0x168] sm:$0xff]
    %v68 = vld [vmem:[%s1 + $0x170] sm:$0xff]
    %v69 = vld [vmem:[%s1 + $0x178] sm:$0xff]
    %v70 = vld [vmem:[%s1 + $0x180] sm:$0xff]
    %v71 = vld [vmem:[%s1 + $0x188] sm:$0xff]
    %v72 = vld [vmem:[%s1 + $0x190] sm:$0xff]
    %v73 = vld [vmem:[%s1 + $0x198] sm:$0xff]
    %v74 = vld [vmem:[%s1 + $0x1a0] sm:$0xff]
    %v75 = vld [vmem:[%s1 + $0x1a8] sm:$0xff]
    %v76 = vld [vmem:[%s1 + $0x1b0] sm:$0xff]
    %v77 = vld [vmem:[%s1 + $0x1b8] sm:$0xff]
    %v78 = vld [vmem:[%s1 + $0x1c0] sm:$0xff]
    %v79 = vld [vmem:[%s1 + $0x1c8] sm:$0xff]
    %v80 = vld [vmem:[%s1 + $0x1d0] sm:$0xff]
    %v81 = vld [vmem:[%s1 + $0x1d8] sm:$0xff]
    %v82 = vld [vmem:[%s1 + $0x1e0] sm:$0xff]
    %v83 = vld [vmem:[%s1 + $0x1e8] sm:$0xff]
    %v84 = vld [vmem:[%s1 + $0x1f0] sm:$0xff]
    %v85 = vld [vmem:[%s1 + $0x1f8] sm:$0xff]
    %86 = vmatprep.subr.mxu0 %v23
    %87 = vmatpush1.msra.mxu0 %v22
    %88 = vmatprep.subr.mxu0 %v27
    %89 = vmatpush1.msra.mxu0 %v26
    %90 = vmatprep.subr.mxu0 %v31
    %91 = vmatpush1.msra.mxu0 %v30
    %92 = vmatprep.subr.mxu0 %v35
    %93 = vmatpush1.msra.mxu0 %v34
    %94 = vmatprep.subr.mxu0 %v39
    %95 = vmatpush1.msra.mxu0 %v38
    %96 = vmatprep.subr.mxu0 %v43
    %97 = vmatpush1.msra.mxu0 %v42
    %98 = vmatprep.subr.mxu0 %v47
    %99 = vmatpush1.msra.mxu0 %v46
    %100 = vmatprep.subr.mxu0 %v51
    %101 = vmatpush1.msra.mxu0 %v50
    %102 = vmatprep.subr.mxu0 %v55
    %103 = vmatpush1.msra.mxu0 %v54
    %104 = vmatprep.subr.mxu0 %v59
    %105 = vmatpush1.msra.mxu0 %v58
    %106 = vmatprep.subr.mxu0 %v63
    %107 = vmatpush1.msra.mxu0 %v62
    %108 = vmatprep.subr.mxu0 %v67
    %109 = vmatpush1.msra.mxu0 %v66
    %110 = vmatprep.subr.mxu0 %v71
    %111 = vmatpush1.msra.mxu0 %v70
    %112 = vmatprep.subr.mxu0 %v75
    %113 = vmatpush1.msra.mxu0 %v74
    %114 = vmatprep.subr.mxu0 %v79
    %115 = vmatpush1.msra.mxu0 %v78
    %116 = vmatprep.subr.mxu0 %v83
    %117 = vmatpush1.msra.mxu0 %v82
    %118 = vmatprep.subr.mxu0 0.0
    %119 = vmatpush1.msra.mxu0 0.0
    %120 = vmatprep.subr.mxu0 0.0
    %121 = vmatpush1.msra.mxu0 0.0
    %122 = vmatprep.subr.mxu0 0.0
    %123 = vmatpush1.msra.mxu0 0.0
    %124 = vmatprep.subr.mxu0 0.0
    %125 = vmatpush1.msra.mxu0 0.0
    %126 = vmatprep.subr.mxu0 0.0
    %127 = vmatpush1.msra.mxu0 0.0
    %128 = vmatprep.subr.mxu0 0.0
    %129 = vmatpush1.msra.mxu0 0.0
    %130 = vmatprep.subr.mxu0 0.0
    %131 = vmatpush1.msra.mxu0 0.0
    %132 = vmatprep.subr.mxu0 0.0
    %133 = vmatpush1.msra.mxu0 0.0
    %134 = vmatprep.subr.mxu0 0.0
    %135 = vmatpush1.msra.mxu0 0.0
    %136 = vmatprep.subr.mxu0 0.0
    %137 = vmatpush1.msra.mxu0 0.0
    %138 = vmatprep.subr.mxu0 0.0
    %139 = vmatpush1.msra.mxu0 0.0
    %140 = vmatprep.subr.mxu0 0.0
    %141 = vmatpush1.msra.mxu0 0.0
    %142 = vmatprep.subr.mxu0 0.0
    %143 = vmatpush1.msra.mxu0 0.0
    %144 = vmatprep.subr.mxu0 0.0
    %145 = vmatpush1.msra.mxu0 0.0
    %146 = vmatprep.subr.mxu0 0.0
    %147 = vmatpush1.msra.mxu0 0.0
    %148 = vmatprep.subr.mxu0 0.0
    %149 = vmatpush1.msra.mxu0 0.0
    %150 = vmatprep.mubr.f32.mxu0 0.0
    %151 = vmatmul.mubr.f32.gmra.mrb[0].mxu0 %v21
    %v152 = vpop.f32.mrb[0].mxu0
    %v153 = vadd.f32 0.0, %v152
    %v154 = vpop.f32.mrb[0].mxu0
    %v155 = vadd.f32 0.0, %v154
    %156 = vdwg.mxu0
    %157 = vmatprep.subr.mxu0 %v25
    %158 = vmatpush1.msra.mxu0 %v24
    %159 = vmatprep.subr.mxu0 %v29
    %160 = vmatpush1.msra.mxu0 %v28
    %161 = vmatprep.subr.mxu0 %v33
    %162 = vmatpush1.msra.mxu0 %v32
    %163 = vmatprep.subr.mxu0 %v37
    %164 = vmatpush1.msra.mxu0 %v36
    %165 = vmatprep.subr.mxu0 %v41
    %166 = vmatpush1.msra.mxu0 %v40
    %167 = vmatprep.subr.mxu0 %v45
    %168 = vmatpush1.msra.mxu0 %v44
    %169 = vmatprep.subr.mxu0 %v49
    %170 = vmatpush1.msra.mxu0 %v48
    %171 = vmatprep.subr.mxu0 %v53
    %172 = vmatpush1.msra.mxu0 %v52
    %173 = vmatprep.subr.mxu0 %v57
    %174 = vmatpush1.msra.mxu0 %v56
    %175 = vmatprep.subr.mxu0 %v61
    %176 = vmatpush1.msra.mxu0 %v60
    %177 = vmatprep.subr.mxu0 %v65
    %178 = vmatpush1.msra.mxu0 %v64
    %179 = vmatprep.subr.mxu0 %v69
    %180 = vmatpush1.msra.mxu0 %v68
    %181 = vmatprep.subr.mxu0 %v73
    %182 = vmatpush1.msra.mxu0 %v72
    %183 = vmatprep.subr.mxu0 %v77
    %184 = vmatpush1.msra.mxu0 %v76
    %185 = vmatprep.subr.mxu0 %v81
    %186 = vmatpush1.msra.mxu0 %v80
    %187 = vmatprep.subr.mxu0 %v85
    %188 = vmatpush1.msra.mxu0 %v84
    %189 = vmatprep.subr.mxu0 0.0
    %190 = vmatpush1.msra.mxu0 0.0
    %191 = vmatprep.subr.mxu0 0.0
    %192 = vmatpush1.msra.mxu0 0.0
    %193 = vmatprep.subr.mxu0 0.0
    %194 = vmatpush1.msra.mxu0 0.0
    %195 = vmatprep.subr.mxu0 0.0
    %196 = vmatpush1.msra.mxu0 0.0
    %197 = vmatprep.subr.mxu0 0.0
    %198 = vmatpush1.msra.mxu0 0.0
    %199 = vmatprep.subr.mxu0 0.0
    %200 = vmatpush1.msra.mxu0 0.0
    %201 = vmatprep.subr.mxu0 0.0
    %202 = vmatpush1.msra.mxu0 0.0
    %203 = vmatprep.subr.mxu0 0.0
    %204 = vmatpush1.msra.mxu0 0.0
    %205 = vmatprep.subr.mxu0 0.0
    %206 = vmatpush1.msra.mxu0 0.0
    %207 = vmatprep.subr.mxu0 0.0
    %208 = vmatpush1.msra.mxu0 0.0
    %209 = vmatprep.subr.mxu0 0.0
    %210 = vmatpush1.msra.mxu0 0.0
    %211 = vmatprep.subr.mxu0 0.0
    %212 = vmatpush1.msra.mxu0 0.0
    %213 = vmatprep.subr.mxu0 0.0
    %214 = vmatpush1.msra.mxu0 0.0
    %215 = vmatprep.subr.mxu0 0.0
    %216 = vmatpush1.msra.mxu0 0.0
    %217 = vmatprep.subr.mxu0 0.0
    %218 = vmatpush1.msra.mxu0 0.0
    %219 = vmatprep.subr.mxu0 0.0
    %220 = vmatpush1.msra.mxu0 0.0
    %221 = vmatprep.mubr.f32.mxu0 0.0
    %222 = vmatmul.mubr.f32.gmra.mrb[0].mxu0 %v21
    %v223 = vpop.f32.mrb[0].mxu0
    %v224 = vadd.f32 0.0, %v223
    %v225 = vpop.f32.mrb[0].mxu0
    %v226 = vadd.f32 0.0, %v225
    %227 = vdwg.mxu0
    %v228 = vld [vmem:[%s2] sm:$0xff]
    %v229 = vld [vmem:[%s3] sm:$0xff]
    %v230 = vld [vmem:[%s3 + $0x8] sm:$0xff]
    %v231 = vld [vmem:[%s3 + $0x10] sm:$0xff]
    %v232 = vld [vmem:[%s3 + $0x18] sm:$0xff]
    %v233 = vld [vmem:[%s3 + $0x20] sm:$0xff]
    %v234 = vld [vmem:[%s3 + $0x28] sm:$0xff]
    %v235 = vld [vmem:[%s3 + $0x30] sm:$0xff]
    %v236 = vld [vmem:[%s3 + $0x38] sm:$0xff]
    %v237 = vld [vmem:[%s3 + $0x40] sm:$0xff]
    %v238 = vld [vmem:[%s3 + $0x48] sm:$0xff]
    %v239 = vld [vmem:[%s3 + $0x50] sm:$0xff]
    %v240 = vld [vmem:[%s3 + $0x58] sm:$0xff]
    %v241 = vld [vmem:[%s3 + $0x60] sm:$0xff]
    %v242 = vld [vmem:[%s3 + $0x68] sm:$0xff]
    %v243 = vld [vmem:[%s3 + $0x70] sm:$0xff]
    %v244 = vld [vmem:[%s3 + $0x78] sm:$0xff]
    %v245 = vld [vmem:[%s3 + $0x80] sm:$0xff]
    %v246 = vld [vmem:[%s3 + $0x88] sm:$0xff]
    %v247 = vld [vmem:[%s3 + $0x90] sm:$0xff]
    %v248 = vld [vmem:[%s3 + $0x98] sm:$0xff]
    %v249 = vld [vmem:[%s3 + $0xa0] sm:$0xff]
    %v250 = vld [vmem:[%s3 + $0xa8] sm:$0xff]
    %v251 = vld [vmem:[%s3 + $0xb0] sm:$0xff]
    %v252 = vld [vmem:[%s3 + $0xb8] sm:$0xff]
    %v253 = vld [vmem:[%s3 + $0xc0] sm:$0xff]
    %v254 = vld [vmem:[%s3 + $0xc8] sm:$0xff]
    %v255 = vld [vmem:[%s3 + $0xd0] sm:$0xff]
    %v256 = vld [vmem:[%s3 + $0xd8] sm:$0xff]
    %v257 = vld [vmem:[%s3 + $0xe0] sm:$0xff]
    %v258 = vld [vmem:[%s3 + $0xe8] sm:$0xff]
    %v259 = vld [vmem:[%s3 + $0xf0] sm:$0xff]
    %v260 = vld [vmem:[%s3 + $0xf8] sm:$0xff]
    %v261 = vld [vmem:[%s3 + $0x100] sm:$0xff]
    %v262 = vld [vmem:[%s3 + $0x108] sm:$0xff]
    %v263 = vld [vmem:[%s3 + $0x110] sm:$0xff]
    %v264 = vld [vmem:[%s3 + $0x118] sm:$0xff]
    %v265 = vld [vmem:[%s3 + $0x120] sm:$0xff]
    %v266 = vld [vmem:[%s3 + $0x128] sm:$0xff]
    %v267 = vld [vmem:[%s3 + $0x130] sm:$0xff]
    %v268 = vld [vmem:[%s3 + $0x138] sm:$0xff]
    %v269 = vld [vmem:[%s3 + $0x140] sm:$0xff]
    %v270 = vld [vmem:[%s3 + $0x148] sm:$0xff]
    %v271 = vld [vmem:[%s3 + $0x150] sm:$0xff]
    %v272 = vld [vmem:[%s3 + $0x158] sm:$0xff]
    %v273 = vld [vmem:[%s3 + $0x160] sm:$0xff]
    %v274 = vld [vmem:[%s3 + $0x168] sm:$0xff]
    %v275 = vld [vmem:[%s3 + $0x170] sm:$0xff]
    %v276 = vld [vmem:[%s3 + $0x178] sm:$0xff]
    %v277 = vld [vmem:[%s3 + $0x180] sm:$0xff]
    %v278 = vld [vmem:[%s3 + $0x188] sm:$0xff]
    %v279 = vld [vmem:[%s3 + $0x190] sm:$0xff]
    %v280 = vld [vmem:[%s3 + $0x198] sm:$0xff]
    %v281 = vld [vmem:[%s3 + $0x1a0] sm:$0xff]
    %v282 = vld [vmem:[%s3 + $0x1a8] sm:$0xff]
    %v283 = vld [vmem:[%s3 + $0x1b0] sm:$0xff]
    %v284 = vld [vmem:[%s3 + $0x1b8] sm:$0xff]
    %v285 = vld [vmem:[%s3 + $0x1c0] sm:$0xff]
    %v286 = vld [vmem:[%s3 + $0x1c8] sm:$0xff]
    %v287 = vld [vmem:[%s3 + $0x1d0] sm:$0xff]
    %v288 = vld [vmem:[%s3 + $0x1d8] sm:$0xff]
    %v289 = vld [vmem:[%s3 + $0x1e0] sm:$0xff]
    %v290 = vld [vmem:[%s3 + $0x1e8] sm:$0xff]
    %v291 = vld [vmem:[%s3 + $0x1f0] sm:$0xff]
    %v292 = vld [vmem:[%s3 + $0x1f8] sm:$0xff]
    %293 = vmatprep.subr.mxu0 %v230
    %294 = vmatpush1.msra.mxu0 %v229
    %295 = vmatprep.subr.mxu0 %v234
    %296 = vmatpush1.msra.mxu0 %v233
    %297 = vmatprep.subr.mxu0 %v238
    %298 = vmatpush1.msra.mxu0 %v237
    %299 = vmatprep.subr.mxu0 %v242
    %300 = vmatpush1.msra.mxu0 %v241
    %301 = vmatprep.subr.mxu0 %v246
    %302 = vmatpush1.msra.mxu0 %v245
    %303 = vmatprep.subr.mxu0 %v250
    %304 = vmatpush1.msra.mxu0 %v249
    %305 = vmatprep.subr.mxu0 %v254
    %306 = vmatpush1.msra.mxu0 %v253
    %307 = vmatprep.subr.mxu0 %v258
    %308 = vmatpush1.msra.mxu0 %v257
    %309 = vmatprep.subr.mxu0 %v262
    %310 = vmatpush1.msra.mxu0 %v261
    %311 = vmatprep.subr.mxu0 %v266
    %312 = vmatpush1.msra.mxu0 %v265
    %313 = vmatprep.subr.mxu0 %v270
    %314 = vmatpush1.msra.mxu0 %v269
    %315 = vmatprep.subr.mxu0 %v274
    %316 = vmatpush1.msra.mxu0 %v273
    %317 = vmatprep.subr.mxu0 %v278
    %318 = vmatpush1.msra.mxu0 %v277
    %319 = vmatprep.subr.mxu0 %v282
    %320 = vmatpush1.msra.mxu0 %v281
    %321 = vmatprep.subr.mxu0 %v286
    %322 = vmatpush1.msra.mxu0 %v285
    %323 = vmatprep.subr.mxu0 %v290
    %324 = vmatpush1.msra.mxu0 %v289
    %325 = vmatprep.subr.mxu0 0.0
    %326 = vmatpush1.msra.mxu0 0.0
    %327 = vmatprep.subr.mxu0 0.0
    %328 = vmatpush1.msra.mxu0 0.0
    %329 = vmatprep.subr.mxu0 0.0
    %330 = vmatpush1.msra.mxu0 0.0
    %331 = vmatprep.subr.mxu0 0.0
    %332 = vmatpush1.msra.mxu0 0.0
    %333 = vmatprep.subr.mxu0 0.0
    %334 = vmatpush1.msra.mxu0 0.0
    %335 = vmatprep.subr.mxu0 0.0
    %336 = vmatpush1.msra.mxu0 0.0
    %337 = vmatprep.subr.mxu0 0.0
    %338 = vmatpush1.msra.mxu0 0.0
    %339 = vmatprep.subr.mxu0 0.0
    %340 = vmatpush1.msra.mxu0 0.0
    %341 = vmatprep.subr.mxu0 0.0
    %342 = vmatpush1.msra.mxu0 0.0
    %343 = vmatprep.subr.mxu0 0.0
    %344 = vmatpush1.msra.mxu0 0.0
    %345 = vmatprep.subr.mxu0 0.0
    %346 = vmatpush1.msra.mxu0 0.0
    %347 = vmatprep.subr.mxu0 0.0
    %348 = vmatpush1.msra.mxu0 0.0
    %349 = vmatprep.subr.mxu0 0.0
    %350 = vmatpush1.msra.mxu0 0.0
    %351 = vmatprep.subr.mxu0 0.0
    %352 = vmatpush1.msra.mxu0 0.0
    %353 = vmatprep.subr.mxu0 0.0
    %354 = vmatpush1.msra.mxu0 0.0
    %355 = vmatprep.subr.mxu0 0.0
    %356 = vmatpush1.msra.mxu0 0.0
    %357 = vmatprep.mubr.f32.mxu0 0.0
    %358 = vmatmul.mubr.f32.gmra.mrb[0].mxu0 %v228
    %v359 = vpop.f32.mrb[0].mxu0
    %v360 = vadd.f32 0.0, %v359
    %v361 = vpop.f32.mrb[0].mxu0
    %v362 = vadd.f32 0.0, %v361
    %363 = vdwg.mxu0
    %364 = vmatprep.subr.mxu0 %v232
    %365 = vmatpush1.msra.mxu0 %v231
    %366 = vmatprep.subr.mxu0 %v236
    %367 = vmatpush1.msra.mxu0 %v235
    %368 = vmatprep.subr.mxu0 %v240
    %369 = vmatpush1.msra.mxu0 %v239
    %370 = vmatprep.subr.mxu0 %v244
    %371 = vmatpush1.msra.mxu0 %v243
    %372 = vmatprep.subr.mxu0 %v248
    %373 = vmatpush1.msra.mxu0 %v247
    %374 = vmatprep.subr.mxu0 %v252
    %375 = vmatpush1.msra.mxu0 %v251
    %376 = vmatprep.subr.mxu0 %v256
    %377 = vmatpush1.msra.mxu0 %v255
    %378 = vmatprep.subr.mxu0 %v260
    %379 = vmatpush1.msra.mxu0 %v259
    %380 = vmatprep.subr.mxu0 %v264
    %381 = vmatpush1.msra.mxu0 %v263
    %382 = vmatprep.subr.mxu0 %v268
    %383 = vmatpush1.msra.mxu0 %v267
    %384 = vmatprep.subr.mxu0 %v272
    %385 = vmatpush1.msra.mxu0 %v271
    %386 = vmatprep.subr.mxu0 %v276
    %387 = vmatpush1.msra.mxu0 %v275
    %388 = vmatprep.subr.mxu0 %v280
    %389 = vmatpush1.msra.mxu0 %v279
    %390 = vmatprep.subr.mxu0 %v284
    %391 = vmatpush1.msra.mxu0 %v283
    %392 = vmatprep.subr.mxu0 %v288
    %393 = vmatpush1.msra.mxu0 %v287
    %394 = vmatprep.subr.mxu0 %v292
    %395 = vmatpush1.msra.mxu0 %v291
    %396 = vmatprep.subr.mxu0 0.0
    %397 = vmatpush1.msra.mxu0 0.0
    %398 = vmatprep.subr.mxu0 0.0
    %399 = vmatpush1.msra.mxu0 0.0
    %400 = vmatprep.subr.mxu0 0.0
    %401 = vmatpush1.msra.mxu0 0.0
    %402 = vmatprep.subr.mxu0 0.0
    %403 = vmatpush1.msra.mxu0 0.0
    %404 = vmatprep.subr.mxu0 0.0
    %405 = vmatpush1.msra.mxu0 0.0
    %406 = vmatprep.subr.mxu0 0.0
    %407 = vmatpush1.msra.mxu0 0.0
    %408 = vmatprep.subr.mxu0 0.0
    %409 = vmatpush1.msra.mxu0 0.0
    %410 = vmatprep.subr.mxu0 0.0
    %411 = vmatpush1.msra.mxu0 0.0
    %412 = vmatprep.subr.mxu0 0.0
    %413 = vmatpush1.msra.mxu0 0.0
    %414 = vmatprep.subr.mxu0 0.0
    %415 = vmatpush1.msra.mxu0 0.0
    %416 = vmatprep.subr.mxu0 0.0
    %417 = vmatpush1.msra.mxu0 0.0
    %418 = vmatprep.subr.mxu0 0.0
    %419 = vmatpush1.msra.mxu0 0.0
    %420 = vmatprep.subr.mxu0 0.0
    %421 = vmatpush1.msra.mxu0 0.0
    %422 = vmatprep.subr.mxu0 0.0
    %423 = vmatpush1.msra.mxu0 0.0
    %424 = vmatprep.subr.mxu0 0.0
    %425 = vmatpush1.msra.mxu0 0.0
    %426 = vmatprep.subr.mxu0 0.0
    %427 = vmatpush1.msra.mxu0 0.0
    %428 = vmatprep.mubr.f32.mxu0 0.0
    %429 = vmatmul.mubr.f32.gmra.mrb[0].mxu0 %v228
    %v430 = vpop.f32.mrb[0].mxu0
    %v431 = vadd.f32 0.0, %v430
    %v432 = vpop.f32.mrb[0].mxu0
    %v433 = vadd.f32 0.0, %v432
    %434 = vdwg.mxu0
    %v435 = vld [vmem:[%s4] sm:$0xff]
    %v436 = vand.u32 2147483647, %v153
    %vm437 = vcmp.le.f32.partialorder %v436, 0.7853982
    %vm438 = vcmp.lt.s32.totalorder %v153, 0
    %v439 = vand.u32 %v153, 2139095040
    %v440 = vshrl.u32 %v439, 23
    %v441 = vsub.s32 %v440, 127
    %v442 = vand.u32 2147483647, %v153
    %v443 = vand.u32 %v442, 8388607
    %v444 = vor.u32 %v443, 8388608
    %v445 = vsub.s32 0, %v444
    %v446 = vadd.s32 %v441, 1
    %vm447 = vcmp.gt.s32.totalorder %v446, 0
    %v448 = vsel %vm447, %v446, 0
    %v449 = vshrl.u32 %v448, 5
    %v450 = vand.u32 %v448, 31
    %v451 = vsub.s32 32, %v450
    %v452 = vshrl.u32 683565275, %v451
    %v453 = vshll.u32 683565275, %v450
    %v454 = vshrl.u32 2475754826, %v451
    %v455 = vor.u32 %v453, %v454
    %v456 = vshll.u32 2475754826, %v450
    %v457 = vshrl.u32 2131351028, %v451
    %v458 = vor.u32 %v456, %v457
    %v459 = vshll.u32 2131351028, %v450
    %v460 = vshrl.u32 2102212464, %v451
    %v461 = vor.u32 %v459, %v460
    %v462 = vshll.u32 2102212464, %v450
    %v463 = vshrl.u32 920167782, %v451
    %v464 = vor.u32 %v462, %v463
    %v465 = vshll.u32 920167782, %v450
    %v466 = vshrl.u32 1326507024, %v451
    %v467 = vor.u32 %v465, %v466
    %vm468 = vcmp.lt.s32.totalorder %v449, 1
    %vm469 = vcmp.lt.s32.totalorder %v449, 2
    %vm470 = vcmp.lt.s32.totalorder %v449, 3
    %vm471 = vcmp.lt.s32.totalorder %v449, 4
    %v472 = vsel %vm468, %v452, %v455
    %v473 = vsel %vm471, %v461, 2102212464
    %v474 = vsel %vm470, %v458, %v473
    %v475 = vsel %vm469, %v472, %v474
    %v476 = vsel %vm468, %v455, %v458
    %v477 = vsel %vm471, %v464, 920167782
    %v478 = vsel %vm470, %v461, %v477
    %v479 = vsel %vm469, %v476, %v478
    %v480 = vsel %vm468, %v458, %v461
    %v481 = vsel %vm471, %v467, 1326507024
    %v482 = vsel %vm470, %v464, %v481
    %v483 = vsel %vm469, %v480, %v482
    %v484 = vshll.u32 %v444, 8
    %v485 = vmul.u32.u64.compose %v484, %v483
    %v486 = vextract.low.u32 %v485
    %v487 = vextract.high.u32 %v485
    %v488 = vmul.u32.u64.compose %v484, %v479
    %v489 = vextract.low.u32 %v488
    %v490 = vextract.high.u32 %v488
    %v491 = vmul.u32 %v484, %v475
    %v492 = vadd.s32 %v487, %v489
    %vm493 = vc.u32 %v487, %v489
    %v494 = vadd.s32 %v490, 1
    %v495 = vsel %vm493, %v494, %v490
    %v496 = vadd.s32 %v491, %v495
    %v497 = vadd.s32 %v496, 536870912
    %v498 = vshrl.u32 %v497, 30
    %v499 = vshll.u32 %v498, 30
    %v500 = vsub.s32 %v496, %v499
    %vm501 = vcmp.lt.s32.totalorder %v500, 0
    %v502 = vsub.s32 0, %v500
    %v503 = vsel %vm501, %v502, %v500
    %v504 = vclz %v503
    %v505 = vsub.s32 %v504, 2
    %vm506 = vcmp.gt.s32.totalorder 0, %v505
    %v507 = vsel %vm506, 0, %v505
    %v508 = vsub.s32 32, %v507
    %v509 = vshll.u32 %v500, %v507
    %v510 = vshrl.u32 %v492, %v508
    %v511 = vor.u32 %v509, %v510
    %v512 = vsub.s32 4294967266, %v507
    %v513 = vadd.s32 %v512, 127
    %v514 = vshll.u32 %v513, 23
    %v515 = vor.u32 4788187, %v514
    %v516 = vand.u32 2147483647, %v515
    %v518 = vcvt.s32.f32 %v511
    %v519 = vmul.f32 %v518, %v516
    %v520 = vxor.u32 %v519, 2147483648
    %v521 = vsel %vm438, %v520, %v519
    %v522 = vsub.s32 4, %v498
    %v523 = vsel %vm438, %v522, %v498
    %v524 = vsel %vm437, %v153, %v521
    %v525 = vsel %vm437, 0, %v523
    %v526 = vcosq.f32.pop %v524
    %v527 = vsinq.f32.pop %v524
    %vm528 = vweird.f32 %v153
    %v529 = vadd.s32 %v525, 3
    %v530 = vand.u32 %v529, 3
    %vm531 = vcmp.lt.s32.totalorder %v530, 2
    %vm532 = vcmp.eq.s32.totalorder %v530, 0
    %v533 = vxor.u32 %v527, 2147483648
    %v534 = vsel %vm532, %v526, %v533
    %vm535 = vcmp.eq.s32.totalorder %v530, 2
    %v536 = vxor.u32 %v526, 2147483648
    %v537 = vsel %vm535, %v536, %v527
    %v538 = vsel %vm531, %v534, %v537
    %v539 = vsel %vm528, nan, %v538
    %v540 = vand.u32 2147483647, %v155
    %vm541 = vcmp.le.f32.partialorder %v540, 0.7853982
    %vm542 = vcmp.lt.s32.totalorder %v155, 0
    %v543 = vand.u32 %v155, 2139095040
    %v544 = vshrl.u32 %v543, 23
    %v545 = vsub.s32 %v544, 127
    %v546 = vand.u32 2147483647, %v155
    %v547 = vand.u32 %v546, 8388607
    %v548 = vor.u32 %v547, 8388608
    %v549 = vsub.s32 0, %v548
    %v550 = vadd.s32 %v545, 1
    %vm551 = vcmp.gt.s32.totalorder %v550, 0
    %v552 = vsel %vm551, %v550, 0
    %v553 = vshrl.u32 %v552, 5
    %v554 = vand.u32 %v552, 31
    %v555 = vsub.s32 32, %v554
    %v556 = vshrl.u32 683565275, %v555
    %v557 = vshll.u32 683565275, %v554
    %v558 = vshrl.u32 2475754826, %v555
    %v559 = vor.u32 %v557, %v558
    %v560 = vshll.u32 2475754826, %v554
    %v561 = vshrl.u32 2131351028, %v555
    %v562 = vor.u32 %v560, %v561
    %v563 = vshll.u32 2131351028, %v554
    %v564 = vshrl.u32 2102212464, %v555
    %v565 = vor.u32 %v563, %v564
    %v566 = vshll.u32 2102212464, %v554
    %v567 = vshrl.u32 920167782, %v555
    %v568 = vor.u32 %v566, %v567
    %v569 = vshll.u32 920167782, %v554
    %v570 = vshrl.u32 1326507024, %v555
    %v571 = vor.u32 %v569, %v570
    %vm572 = vcmp.lt.s32.totalorder %v553, 1
    %vm573 = vcmp.lt.s32.totalorder %v553, 2
    %vm574 = vcmp.lt.s32.totalorder %v553, 3
    %vm575 = vcmp.lt.s32.totalorder %v553, 4
    %v576 = vsel %vm572, %v556, %v559
    %v577 = vsel %vm575, %v565, 2102212464
    %v578 = vsel %vm574, %v562, %v577
    %v579 = vsel %vm573, %v576, %v578
    %v580 = vsel %vm572, %v559, %v562
    %v581 = vsel %vm575, %v568, 920167782
    %v582 = vsel %vm574, %v565, %v581
    %v583 = vsel %vm573, %v580, %v582
    %v584 = vsel %vm572, %v562, %v565
    %v585 = vsel %vm575, %v571, 1326507024
    %v586 = vsel %vm574, %v568, %v585
    %v587 = vsel %vm573, %v584, %v586
    %v588 = vshll.u32 %v548, 8
    %v589 = vmul.u32.u64.compose %v588, %v587
    %v590 = vextract.low.u32 %v589
    %v591 = vextract.high.u32 %v589
    %v592 = vmul.u32.u64.compose %v588, %v583
    %v593 = vextract.low.u32 %v592
    %v594 = vextract.high.u32 %v592
    %v595 = vmul.u32 %v588, %v579
    %v596 = vadd.s32 %v591, %v593
    %vm597 = vc.u32 %v591, %v593
    %v598 = vadd.s32 %v594, 1
    %v599 = vsel %vm597, %v598, %v594
    %v600 = vadd.s32 %v595, %v599
    %v601 = vadd.s32 %v600, 536870912
    %v602 = vshrl.u32 %v601, 30
    %v603 = vshll.u32 %v602, 30
    %v604 = vsub.s32 %v600, %v603
    %vm605 = vcmp.lt.s32.totalorder %v604, 0
    %v606 = vsub.s32 0, %v604
    %v607 = vsel %vm605, %v606, %v604
    %v608 = vclz %v607
    %v609 = vsub.s32 %v608, 2
    %vm610 = vcmp.gt.s32.totalorder 0, %v609
    %v611 = vsel %vm610, 0, %v609
    %v612 = vsub.s32 32, %v611
    %v613 = vshll.u32 %v604, %v611
    %v614 = vshrl.u32 %v596, %v612
    %v615 = vor.u32 %v613, %v614
    %v616 = vsub.s32 4294967266, %v611
    %v617 = vadd.s32 %v616, 127
    %v618 = vshll.u32 %v617, 23
    %v619 = vor.u32 4788187, %v618
    %v620 = vand.u32 2147483647, %v619
    %v622 = vcvt.s32.f32 %v615
    %v623 = vmul.f32 %v622, %v620
    %v624 = vxor.u32 %v623, 2147483648
    %v625 = vsel %vm542, %v624, %v623
    %v626 = vsub.s32 4, %v602
    %v627 = vsel %vm542, %v626, %v602
    %v628 = vsel %vm541, %v155, %v625
    %v629 = vsel %vm541, 0, %v627
    %v630 = vcosq.f32.pop %v628
    %v631 = vsinq.f32.pop %v628
    %vm632 = vweird.f32 %v155
    %v633 = vadd.s32 %v629, 3
    %v634 = vand.u32 %v633, 3
    %vm635 = vcmp.lt.s32.totalorder %v634, 2
    %vm636 = vcmp.eq.s32.totalorder %v634, 0
    %v637 = vxor.u32 %v631, 2147483648
    %v638 = vsel %vm636, %v630, %v637
    %vm639 = vcmp.eq.s32.totalorder %v634, 2
    %v640 = vxor.u32 %v630, 2147483648
    %v641 = vsel %vm639, %v640, %v631
    %v642 = vsel %vm635, %v638, %v641
    %v643 = vsel %vm632, nan, %v642
    %v644 = vand.u32 2147483647, %v224
    %vm645 = vcmp.le.f32.partialorder %v644, 0.7853982
    %vm646 = vcmp.lt.s32.totalorder %v224, 0
    %v647 = vand.u32 %v224, 2139095040
    %v648 = vshrl.u32 %v647, 23
    %v649 = vsub.s32 %v648, 127
    %v650 = vand.u32 2147483647, %v224
    %v651 = vand.u32 %v650, 8388607
    %v652 = vor.u32 %v651, 8388608
    %v653 = vsub.s32 0, %v652
    %v654 = vadd.s32 %v649, 1
    %vm655 = vcmp.gt.s32.totalorder %v654, 0
    %v656 = vsel %vm655, %v654, 0
    %v657 = vshrl.u32 %v656, 5
    %v658 = vand.u32 %v656, 31
    %v659 = vsub.s32 32, %v658
    %v660 = vshrl.u32 683565275, %v659
    %v661 = vshll.u32 683565275, %v658
    %v662 = vshrl.u32 2475754826, %v659
    %v663 = vor.u32 %v661, %v662
    %v664 = vshll.u32 2475754826, %v658
    %v665 = vshrl.u32 2131351028, %v659
    %v666 = vor.u32 %v664, %v665
    %v667 = vshll.u32 2131351028, %v658
    %v668 = vshrl.u32 2102212464, %v659
    %v669 = vor.u32 %v667, %v668
    %v670 = vshll.u32 2102212464, %v658
    %v671 = vshrl.u32 920167782, %v659
    %v672 = vor.u32 %v670, %v671
    %v673 = vshll.u32 920167782, %v658
    %v674 = vshrl.u32 1326507024, %v659
    %v675 = vor.u32 %v673, %v674
    %vm676 = vcmp.lt.s32.totalorder %v657, 1
    %vm677 = vcmp.lt.s32.totalorder %v657, 2
    %vm678 = vcmp.lt.s32.totalorder %v657, 3
    %vm679 = vcmp.lt.s32.totalorder %v657, 4
    %v680 = vsel %vm676, %v660, %v663
    %v681 = vsel %vm679, %v669, 2102212464
    %v682 = vsel %vm678, %v666, %v681
    %v683 = vsel %vm677, %v680, %v682
    %v684 = vsel %vm676, %v663, %v666
    %v685 = vsel %vm679, %v672, 920167782
    %v686 = vsel %vm678, %v669, %v685
    %v687 = vsel %vm677, %v684, %v686
    %v688 = vsel %vm676, %v666, %v669
    %v689 = vsel %vm679, %v675, 1326507024
    %v690 = vsel %vm678, %v672, %v689
    %v691 = vsel %vm677, %v688, %v690
    %v692 = vshll.u32 %v652, 8
    %v693 = vmul.u32.u64.compose %v692, %v691
    %v694 = vextract.low.u32 %v693
    %v695 = vextract.high.u32 %v693
    %v696 = vmul.u32.u64.compose %v692, %v687
    %v697 = vextract.low.u32 %v696
    %v698 = vextract.high.u32 %v696
    %v699 = vmul.u32 %v692, %v683
    %v700 = vadd.s32 %v695, %v697
    %vm701 = vc.u32 %v695, %v697
    %v702 = vadd.s32 %v698, 1
    %v703 = vsel %vm701, %v702, %v698
    %v704 = vadd.s32 %v699, %v703
    %v705 = vadd.s32 %v704, 536870912
    %v706 = vshrl.u32 %v705, 30
    %v707 = vshll.u32 %v706, 30
    %v708 = vsub.s32 %v704, %v707
    %vm709 = vcmp.lt.s32.totalorder %v708, 0
    %v710 = vsub.s32 0, %v708
    %v711 = vsel %vm709, %v710, %v708
    %v712 = vclz %v711
    %v713 = vsub.s32 %v712, 2
    %vm714 = vcmp.gt.s32.totalorder 0, %v713
    %v715 = vsel %vm714, 0, %v713
    %v716 = vsub.s32 32, %v715
    %v717 = vshll.u32 %v708, %v715
    %v718 = vshrl.u32 %v700, %v716
    %v719 = vor.u32 %v717, %v718
    %v720 = vsub.s32 4294967266, %v715
    %v721 = vadd.s32 %v720, 127
    %v722 = vshll.u32 %v721, 23
    %v723 = vor.u32 4788187, %v722
    %v724 = vand.u32 2147483647, %v723
    %v726 = vcvt.s32.f32 %v719
    %v727 = vmul.f32 %v726, %v724
    %v728 = vxor.u32 %v727, 2147483648
    %v729 = vsel %vm646, %v728, %v727
    %v730 = vsub.s32 4, %v706
    %v731 = vsel %vm646, %v730, %v706
    %v732 = vsel %vm645, %v224, %v729
    %v733 = vsel %vm645, 0, %v731
    %v734 = vcosq.f32.pop %v732
    %v735 = vsinq.f32.pop %v732
    %vm736 = vweird.f32 %v224
    %v737 = vadd.s32 %v733, 3
    %v738 = vand.u32 %v737, 3
    %vm739 = vcmp.lt.s32.totalorder %v738, 2
    %vm740 = vcmp.eq.s32.totalorder %v738, 0
    %v741 = vxor.u32 %v735, 2147483648
    %v742 = vsel %vm740, %v734, %v741
    %vm743 = vcmp.eq.s32.totalorder %v738, 2
    %v744 = vxor.u32 %v734, 2147483648
    %v745 = vsel %vm743, %v744, %v735
    %v746 = vsel %vm739, %v742, %v745
    %v747 = vsel %vm736, nan, %v746
    %v748 = vand.u32 2147483647, %v226
    %vm749 = vcmp.le.f32.partialorder %v748, 0.7853982
    %vm750 = vcmp.lt.s32.totalorder %v226, 0
    %v751 = vand.u32 %v226, 2139095040
    %v752 = vshrl.u32 %v751, 23
    %v753 = vsub.s32 %v752, 127
    %v754 = vand.u32 2147483647, %v226
    %v755 = vand.u32 %v754, 8388607
    %v756 = vor.u32 %v755, 8388608
    %v757 = vsub.s32 0, %v756
    %v758 = vadd.s32 %v753, 1
    %vm759 = vcmp.gt.s32.totalorder %v758, 0
    %v760 = vsel %vm759, %v758, 0
    %v761 = vshrl.u32 %v760, 5
    %v762 = vand.u32 %v760, 31
    %v763 = vsub.s32 32, %v762
    %v764 = vshrl.u32 683565275, %v763
    %v765 = vshll.u32 683565275, %v762
    %v766 = vshrl.u32 2475754826, %v763
    %v767 = vor.u32 %v765, %v766
    %v768 = vshll.u32 2475754826, %v762
    %v769 = vshrl.u32 2131351028, %v763
    %v770 = vor.u32 %v768, %v769
    %v771 = vshll.u32 2131351028, %v762
    %v772 = vshrl.u32 2102212464, %v763
    %v773 = vor.u32 %v771, %v772
    %v774 = vshll.u32 2102212464, %v762
    %v775 = vshrl.u32 920167782, %v763
    %v776 = vor.u32 %v774, %v775
    %v777 = vshll.u32 920167782, %v762
    %v778 = vshrl.u32 1326507024, %v763
    %v779 = vor.u32 %v777, %v778
    %vm780 = vcmp.lt.s32.totalorder %v761, 1
    %vm781 = vcmp.lt.s32.totalorder %v761, 2
    %vm782 = vcmp.lt.s32.totalorder %v761, 3
    %vm783 = vcmp.lt.s32.totalorder %v761, 4
    %v784 = vsel %vm780, %v764, %v767
    %v785 = vsel %vm783, %v773, 2102212464
    %v786 = vsel %vm782, %v770, %v785
    %v787 = vsel %vm781, %v784, %v786
    %v788 = vsel %vm780, %v767, %v770
    %v789 = vsel %vm783, %v776, 920167782
    %v790 = vsel %vm782, %v773, %v789
    %v791 = vsel %vm781, %v788, %v790
    %v792 = vsel %vm780, %v770, %v773
    %v793 = vsel %vm783, %v779, 1326507024
    %v794 = vsel %vm782, %v776, %v793
    %v795 = vsel %vm781, %v792, %v794
    %v796 = vshll.u32 %v756, 8
    %v797 = vmul.u32.u64.compose %v796, %v795
    %v798 = vextract.low.u32 %v797
    %v799 = vextract.high.u32 %v797
    %v800 = vmul.u32.u64.compose %v796, %v791
    %v801 = vextract.low.u32 %v800
    %v802 = vextract.high.u32 %v800
    %v803 = vmul.u32 %v796, %v787
    %v804 = vadd.s32 %v799, %v801
    %vm805 = vc.u32 %v799, %v801
    %v806 = vadd.s32 %v802, 1
    %v807 = vsel %vm805, %v806, %v802
    %v808 = vadd.s32 %v803, %v807
    %v809 = vadd.s32 %v808, 536870912
    %v810 = vshrl.u32 %v809, 30
    %v811 = vshll.u32 %v810, 30
    %v812 = vsub.s32 %v808, %v811
    %vm813 = vcmp.lt.s32.totalorder %v812, 0
    %v814 = vsub.s32 0, %v812
    %v815 = vsel %vm813, %v814, %v812
    %v816 = vclz %v815
    %v817 = vsub.s32 %v816, 2
    %vm818 = vcmp.gt.s32.totalorder 0, %v817
    %v819 = vsel %vm818, 0, %v817
    %v820 = vsub.s32 32, %v819
    %v821 = vshll.u32 %v812, %v819
    %v822 = vshrl.u32 %v804, %v820
    %v823 = vor.u32 %v821, %v822
    %v824 = vsub.s32 4294967266, %v819
    %v825 = vadd.s32 %v824, 127
    %v826 = vshll.u32 %v825, 23
    %v827 = vor.u32 4788187, %v826
    %v828 = vand.u32 2147483647, %v827
    %v830 = vcvt.s32.f32 %v823
    %v831 = vmul.f32 %v830, %v828
    %v832 = vxor.u32 %v831, 2147483648
    %v833 = vsel %vm750, %v832, %v831
    %v834 = vsub.s32 4, %v810
    %v835 = vsel %vm750, %v834, %v810
    %v836 = vsel %vm749, %v226, %v833
    %v837 = vsel %vm749, 0, %v835
    %v838 = vcosq.f32.pop %v836
    %v839 = vsinq.f32.pop %v836
    %vm840 = vweird.f32 %v226
    %v841 = vadd.s32 %v837, 3
    %v842 = vand.u32 %v841, 3
    %vm843 = vcmp.lt.s32.totalorder %v842, 2
    %vm844 = vcmp.eq.s32.totalorder %v842, 0
    %v845 = vxor.u32 %v839, 2147483648
    %v846 = vsel %vm844, %v838, %v845
    %vm847 = vcmp.eq.s32.totalorder %v842, 2
    %v848 = vxor.u32 %v838, 2147483648
    %v849 = vsel %vm847, %v848, %v839
    %v850 = vsel %vm843, %v846, %v849
    %v851 = vsel %vm840, nan, %v850
    %v853 = vlaneseq
    %v854 = vshrl.u32 %v853, 7
    %v855 = vsub.s32 0, %v854
    %v856 = vrot.slane %v435, %v855
    %v857 = vlaneseq
    %v858 = vshrl.u32 %v857, 7
    %v859 = vsub.s32 2, %v858
    %v860 = vrot.slane %v435, %v859
    %v861 = vlaneseq
    %v862 = vshrl.u32 %v861, 7
    %v863 = vsub.s32 4, %v862
    %v864 = vrot.slane %v435, %v863
    %v865 = vlaneseq
    %v866 = vshrl.u32 %v865, 7
    %v867 = vsub.s32 6, %v866
    %v868 = vrot.slane %v435, %v867
    %v873 = vlaneseq
    %v874 = vshrl.u32 %v873, 7
    %v875 = vsub.s32 0, %v874
    %v876 = vrot.slane %v856, %v875
    %v877 = vlaneseq
    %v878 = vshrl.u32 %v877, 7
    %v879 = vsub.s32 0, %v878
    %v880 = vrot.slane %v860, %v879
    %v881 = vlaneseq
    %v882 = vshrl.u32 %v881, 7
    %v883 = vsub.s32 0, %v882
    %v884 = vrot.slane %v864, %v883
    %v885 = vlaneseq
    %v886 = vshrl.u32 %v885, 7
    %v887 = vsub.s32 0, %v886
    %v888 = vrot.slane %v868, %v887
    %v889 = vadd.f32 %v539, %v876
    %v890 = vadd.f32 %v643, %v880
    %v891 = vadd.f32 %v747, %v884
    %v892 = vadd.f32 %v851, %v888
    %v893 = vand.u32 2147483647, %v360
    %vm894 = vcmp.le.f32.partialorder %v893, 0.7853982
    %vm895 = vcmp.lt.s32.totalorder %v360, 0
    %v896 = vand.u32 %v360, 2139095040
    %v897 = vshrl.u32 %v896, 23
    %v898 = vsub.s32 %v897, 127
    %v899 = vand.u32 2147483647, %v360
    %v900 = vand.u32 %v899, 8388607
    %v901 = vor.u32 %v900, 8388608
    %v902 = vsub.s32 0, %v901
    %v903 = vadd.s32 %v898, 1
    %vm904 = vcmp.gt.s32.totalorder %v903, 0
    %v905 = vsel %vm904, %v903, 0
    %v906 = vshrl.u32 %v905, 5
    %v907 = vand.u32 %v905, 31
    %v908 = vsub.s32 32, %v907
    %v909 = vshrl.u32 683565275, %v908
    %v910 = vshll.u32 683565275, %v907
    %v911 = vshrl.u32 2475754826, %v908
    %v912 = vor.u32 %v910, %v911
    %v913 = vshll.u32 2475754826, %v907
    %v914 = vshrl.u32 2131351028, %v908
    %v915 = vor.u32 %v913, %v914
    %v916 = vshll.u32 2131351028, %v907
    %v917 = vshrl.u32 2102212464, %v908
    %v918 = vor.u32 %v916, %v917
    %v919 = vshll.u32 2102212464, %v907
    %v920 = vshrl.u32 920167782, %v908
    %v921 = vor.u32 %v919, %v920
    %v922 = vshll.u32 920167782, %v907
    %v923 = vshrl.u32 1326507024, %v908
    %v924 = vor.u32 %v922, %v923
    %vm925 = vcmp.lt.s32.totalorder %v906, 1
    %vm926 = vcmp.lt.s32.totalorder %v906, 2
    %vm927 = vcmp.lt.s32.totalorder %v906, 3
    %vm928 = vcmp.lt.s32.totalorder %v906, 4
    %v929 = vsel %vm925, %v909, %v912
    %v930 = vsel %vm928, %v918, 2102212464
    %v931 = vsel %vm927, %v915, %v930
    %v932 = vsel %vm926, %v929, %v931
    %v933 = vsel %vm925, %v912, %v915
    %v934 = vsel %vm928, %v921, 920167782
    %v935 = vsel %vm927, %v918, %v934
    %v936 = vsel %vm926, %v933, %v935
    %v937 = vsel %vm925, %v915, %v918
    %v938 = vsel %vm928, %v924, 1326507024
    %v939 = vsel %vm927, %v921, %v938
    %v940 = vsel %vm926, %v937, %v939
    %v941 = vshll.u32 %v901, 8
    %v942 = vmul.u32.u64.compose %v941, %v940
    %v943 = vextract.low.u32 %v942
    %v944 = vextract.high.u32 %v942
    %v945 = vmul.u32.u64.compose %v941, %v936
    %v946 = vextract.low.u32 %v945
    %v947 = vextract.high.u32 %v945
    %v948 = vmul.u32 %v941, %v932
    %v949 = vadd.s32 %v944, %v946
    %vm950 = vc.u32 %v944, %v946
    %v951 = vadd.s32 %v947, 1
    %v952 = vsel %vm950, %v951, %v947
    %v953 = vadd.s32 %v948, %v952
    %v954 = vadd.s32 %v953, 536870912
    %v955 = vshrl.u32 %v954, 30
    %v956 = vshll.u32 %v955, 30
    %v957 = vsub.s32 %v953, %v956
    %vm958 = vcmp.lt.s32.totalorder %v957, 0
    %v959 = vsub.s32 0, %v957
    %v960 = vsel %vm958, %v959, %v957
    %v961 = vclz %v960
    %v962 = vsub.s32 %v961, 2
    %vm963 = vcmp.gt.s32.totalorder 0, %v962
    %v964 = vsel %vm963, 0, %v962
    %v965 = vsub.s32 32, %v964
    %v966 = vshll.u32 %v957, %v964
    %v967 = vshrl.u32 %v949, %v965
    %v968 = vor.u32 %v966, %v967
    %v969 = vsub.s32 4294967266, %v964
    %v970 = vadd.s32 %v969, 127
    %v971 = vshll.u32 %v970, 23
    %v972 = vor.u32 4788187, %v971
    %v973 = vand.u32 2147483647, %v972
    %v975 = vcvt.s32.f32 %v968
    %v976 = vmul.f32 %v975, %v973
    %v977 = vxor.u32 %v976, 2147483648
    %v978 = vsel %vm895, %v977, %v976
    %v979 = vsub.s32 4, %v955
    %v980 = vsel %vm895, %v979, %v955
    %v981 = vsel %vm894, %v360, %v978
    %v982 = vsel %vm894, 0, %v980
    %v983 = vcosq.f32.pop %v981
    %v984 = vsinq.f32.pop %v981
    %vm985 = vweird.f32 %v360
    %v986 = vadd.s32 %v982, 3
    %v987 = vand.u32 %v986, 3
    %vm988 = vcmp.lt.s32.totalorder %v987, 2
    %vm989 = vcmp.eq.s32.totalorder %v987, 0
    %v990 = vxor.u32 %v984, 2147483648
    %v991 = vsel %vm989, %v983, %v990
    %vm992 = vcmp.eq.s32.totalorder %v987, 2
    %v993 = vxor.u32 %v983, 2147483648
    %v994 = vsel %vm992, %v993, %v984
    %v995 = vsel %vm988, %v991, %v994
    %v996 = vsel %vm985, nan, %v995
    %v997 = vand.u32 2147483647, %v362
    %vm998 = vcmp.le.f32.partialorder %v997, 0.7853982
    %vm999 = vcmp.lt.s32.totalorder %v362, 0
    %v1000 = vand.u32 %v362, 2139095040
    %v1001 = vshrl.u32 %v1000, 23
    %v1002 = vsub.s32 %v1001, 127
    %v1003 = vand.u32 2147483647, %v362
    %v1004 = vand.u32 %v1003, 8388607
    %v1005 = vor.u32 %v1004, 8388608
    %v1006 = vsub.s32 0, %v1005
    %v1007 = vadd.s32 %v1002, 1
    %vm1008 = vcmp.gt.s32.totalorder %v1007, 0
    %v1009 = vsel %vm1008, %v1007, 0
    %v1010 = vshrl.u32 %v1009, 5
    %v1011 = vand.u32 %v1009, 31
    %v1012 = vsub.s32 32, %v1011
    %v1013 = vshrl.u32 683565275, %v1012
    %v1014 = vshll.u32 683565275, %v1011
    %v1015 = vshrl.u32 2475754826, %v1012
    %v1016 = vor.u32 %v1014, %v1015
    %v1017 = vshll.u32 2475754826, %v1011
    %v1018 = vshrl.u32 2131351028, %v1012
    %v1019 = vor.u32 %v1017, %v1018
    %v1020 = vshll.u32 2131351028, %v1011
    %v1021 = vshrl.u32 2102212464, %v1012
    %v1022 = vor.u32 %v1020, %v1021
    %v1023 = vshll.u32 2102212464, %v1011
    %v1024 = vshrl.u32 920167782, %v1012
    %v1025 = vor.u32 %v1023, %v1024
    %v1026 = vshll.u32 920167782, %v1011
    %v1027 = vshrl.u32 1326507024, %v1012
    %v1028 = vor.u32 %v1026, %v1027
    %vm1029 = vcmp.lt.s32.totalorder %v1010, 1
    %vm1030 = vcmp.lt.s32.totalorder %v1010, 2
    %vm1031 = vcmp.lt.s32.totalorder %v1010, 3
    %vm1032 = vcmp.lt.s32.totalorder %v1010, 4
    %v1033 = vsel %vm1029, %v1013, %v1016
    %v1034 = vsel %vm1032, %v1022, 2102212464
    %v1035 = vsel %vm1031, %v1019, %v1034
    %v1036 = vsel %vm1030, %v1033, %v1035
    %v1037 = vsel %vm1029, %v1016, %v1019
    %v1038 = vsel %vm1032, %v1025, 920167782
    %v1039 = vsel %vm1031, %v1022, %v1038
    %v1040 = vsel %vm1030, %v1037, %v1039
    %v1041 = vsel %vm1029, %v1019, %v1022
    %v1042 = vsel %vm1032, %v1028, 1326507024
    %v1043 = vsel %vm1031, %v1025, %v1042
    %v1044 = vsel %vm1030, %v1041, %v1043
    %v1045 = vshll.u32 %v1005, 8
    %v1046 = vmul.u32.u64.compose %v1045, %v1044
    %v1047 = vextract.low.u32 %v1046
    %v1048 = vextract.high.u32 %v1046
    %v1049 = vmul.u32.u64.compose %v1045, %v1040
    %v1050 = vextract.low.u32 %v1049
    %v1051 = vextract.high.u32 %v1049
    %v1052 = vmul.u32 %v1045, %v1036
    %v1053 = vadd.s32 %v1048, %v1050
    %vm1054 = vc.u32 %v1048, %v1050
    %v1055 = vadd.s32 %v1051, 1
    %v1056 = vsel %vm1054, %v1055, %v1051
    %v1057 = vadd.s32 %v1052, %v1056
    %v1058 = vadd.s32 %v1057, 536870912
    %v1059 = vshrl.u32 %v1058, 30
    %v1060 = vshll.u32 %v1059, 30
    %v1061 = vsub.s32 %v1057, %v1060
    %vm1062 = vcmp.lt.s32.totalorder %v1061, 0
    %v1063 = vsub.s32 0, %v1061
    %v1064 = vsel %vm1062, %v1063, %v1061
    %v1065 = vclz %v1064
    %v1066 = vsub.s32 %v1065, 2
    %vm1067 = vcmp.gt.s32.totalorder 0, %v1066
    %v1068 = vsel %vm1067, 0, %v1066
    %v1069 = vsub.s32 32, %v1068
    %v1070 = vshll.u32 %v1061, %v1068
    %v1071 = vshrl.u32 %v1053, %v1069
    %v1072 = vor.u32 %v1070, %v1071
    %v1073 = vsub.s32 4294967266, %v1068
    %v1074 = vadd.s32 %v1073, 127
    %v1075 = vshll.u32 %v1074, 23
    %v1076 = vor.u32 4788187, %v1075
    %v1077 = vand.u32 2147483647, %v1076
    %v1079 = vcvt.s32.f32 %v1072
    %v1080 = vmul.f32 %v1079, %v1077
    %v1081 = vxor.u32 %v1080, 2147483648
    %v1082 = vsel %vm999, %v1081, %v1080
    %v1083 = vsub.s32 4, %v1059
    %v1084 = vsel %vm999, %v1083, %v1059
    %v1085 = vsel %vm998, %v362, %v1082
    %v1086 = vsel %vm998, 0, %v1084
    %v1087 = vcosq.f32.pop %v1085
    %v1088 = vsinq.f32.pop %v1085
    %vm1089 = vweird.f32 %v362
    %v1090 = vadd.s32 %v1086, 3
    %v1091 = vand.u32 %v1090, 3
    %vm1092 = vcmp.lt.s32.totalorder %v1091, 2
    %vm1093 = vcmp.eq.s32.totalorder %v1091, 0
    %v1094 = vxor.u32 %v1088, 2147483648
    %v1095 = vsel %vm1093, %v1087, %v1094
    %vm1096 = vcmp.eq.s32.totalorder %v1091, 2
    %v1097 = vxor.u32 %v1087, 2147483648
    %v1098 = vsel %vm1096, %v1097, %v1088
    %v1099 = vsel %vm1092, %v1095, %v1098
    %v1100 = vsel %vm1089, nan, %v1099
    %v1101 = vand.u32 2147483647, %v431
    %vm1102 = vcmp.le.f32.partialorder %v1101, 0.7853982
    %vm1103 = vcmp.lt.s32.totalorder %v431, 0
    %v1104 = vand.u32 %v431, 2139095040
    %v1105 = vshrl.u32 %v1104, 23
    %v1106 = vsub.s32 %v1105, 127
    %v1107 = vand.u32 2147483647, %v431
    %v1108 = vand.u32 %v1107, 8388607
    %v1109 = vor.u32 %v1108, 8388608
    %v1110 = vsub.s32 0, %v1109
    %v1111 = vadd.s32 %v1106, 1
    %vm1112 = vcmp.gt.s32.totalorder %v1111, 0
    %v1113 = vsel %vm1112, %v1111, 0
    %v1114 = vshrl.u32 %v1113, 5
    %v1115 = vand.u32 %v1113, 31
    %v1116 = vsub.s32 32, %v1115
    %v1117 = vshrl.u32 683565275, %v1116
    %v1118 = vshll.u32 683565275, %v1115
    %v1119 = vshrl.u32 2475754826, %v1116
    %v1120 = vor.u32 %v1118, %v1119
    %v1121 = vshll.u32 2475754826, %v1115
    %v1122 = vshrl.u32 2131351028, %v1116
    %v1123 = vor.u32 %v1121, %v1122
    %v1124 = vshll.u32 2131351028, %v1115
    %v1125 = vshrl.u32 2102212464, %v1116
    %v1126 = vor.u32 %v1124, %v1125
    %v1127 = vshll.u32 2102212464, %v1115
    %v1128 = vshrl.u32 920167782, %v1116
    %v1129 = vor.u32 %v1127, %v1128
    %v1130 = vshll.u32 920167782, %v1115
    %v1131 = vshrl.u32 1326507024, %v1116
    %v1132 = vor.u32 %v1130, %v1131
    %vm1133 = vcmp.lt.s32.totalorder %v1114, 1
    %vm1134 = vcmp.lt.s32.totalorder %v1114, 2
    %vm1135 = vcmp.lt.s32.totalorder %v1114, 3
    %vm1136 = vcmp.lt.s32.totalorder %v1114, 4
    %v1137 = vsel %vm1133, %v1117, %v1120
    %v1138 = vsel %vm1136, %v1126, 2102212464
    %v1139 = vsel %vm1135, %v1123, %v1138
    %v1140 = vsel %vm1134, %v1137, %v1139
    %v1141 = vsel %vm1133, %v1120, %v1123
    %v1142 = vsel %vm1136, %v1129, 920167782
    %v1143 = vsel %vm1135, %v1126, %v1142
    %v1144 = vsel %vm1134, %v1141, %v1143
    %v1145 = vsel %vm1133, %v1123, %v1126
    %v1146 = vsel %vm1136, %v1132, 1326507024
    %v1147 = vsel %vm1135, %v1129, %v1146
    %v1148 = vsel %vm1134, %v1145, %v1147
    %v1149 = vshll.u32 %v1109, 8
    %v1150 = vmul.u32.u64.compose %v1149, %v1148
    %v1151 = vextract.low.u32 %v1150
    %v1152 = vextract.high.u32 %v1150
    %v1153 = vmul.u32.u64.compose %v1149, %v1144
    %v1154 = vextract.low.u32 %v1153
    %v1155 = vextract.high.u32 %v1153
    %v1156 = vmul.u32 %v1149, %v1140
    %v1157 = vadd.s32 %v1152, %v1154
    %vm1158 = vc.u32 %v1152, %v1154
    %v1159 = vadd.s32 %v1155, 1
    %v1160 = vsel %vm1158, %v1159, %v1155
    %v1161 = vadd.s32 %v1156, %v1160
    %v1162 = vadd.s32 %v1161, 536870912
    %v1163 = vshrl.u32 %v1162, 30
    %v1164 = vshll.u32 %v1163, 30
    %v1165 = vsub.s32 %v1161, %v1164
    %vm1166 = vcmp.lt.s32.totalorder %v1165, 0
    %v1167 = vsub.s32 0, %v1165
    %v1168 = vsel %vm1166, %v1167, %v1165
    %v1169 = vclz %v1168
    %v1170 = vsub.s32 %v1169, 2
    %vm1171 = vcmp.gt.s32.totalorder 0, %v1170
    %v1172 = vsel %vm1171, 0, %v1170
    %v1173 = vsub.s32 32, %v1172
    %v1174 = vshll.u32 %v1165, %v1172
    %v1175 = vshrl.u32 %v1157, %v1173
    %v1176 = vor.u32 %v1174, %v1175
    %v1177 = vsub.s32 4294967266, %v1172
    %v1178 = vadd.s32 %v1177, 127
    %v1179 = vshll.u32 %v1178, 23
    %v1180 = vor.u32 4788187, %v1179
    %v1181 = vand.u32 2147483647, %v1180
    %v1183 = vcvt.s32.f32 %v1176
    %v1184 = vmul.f32 %v1183, %v1181
    %v1185 = vxor.u32 %v1184, 2147483648
    %v1186 = vsel %vm1103, %v1185, %v1184
    %v1187 = vsub.s32 4, %v1163
    %v1188 = vsel %vm1103, %v1187, %v1163
    %v1189 = vsel %vm1102, %v431, %v1186
    %v1190 = vsel %vm1102, 0, %v1188
    %v1191 = vcosq.f32.pop %v1189
    %v1192 = vsinq.f32.pop %v1189
    %vm1193 = vweird.f32 %v431
    %v1194 = vadd.s32 %v1190, 3
    %v1195 = vand.u32 %v1194, 3
    %vm1196 = vcmp.lt.s32.totalorder %v1195, 2
    %vm1197 = vcmp.eq.s32.totalorder %v1195, 0
    %v1198 = vxor.u32 %v1192, 2147483648
    %v1199 = vsel %vm1197, %v1191, %v1198
    %vm1200 = vcmp.eq.s32.totalorder %v1195, 2
    %v1201 = vxor.u32 %v1191, 2147483648
    %v1202 = vsel %vm1200, %v1201, %v1192
    %v1203 = vsel %vm1196, %v1199, %v1202
    %v1204 = vsel %vm1193, nan, %v1203
    %v1205 = vand.u32 2147483647, %v433
    %vm1206 = vcmp.le.f32.partialorder %v1205, 0.7853982
    %vm1207 = vcmp.lt.s32.totalorder %v433, 0
    %v1208 = vand.u32 %v433, 2139095040
    %v1209 = vshrl.u32 %v1208, 23
    %v1210 = vsub.s32 %v1209, 127
    %v1211 = vand.u32 2147483647, %v433
    %v1212 = vand.u32 %v1211, 8388607
    %v1213 = vor.u32 %v1212, 8388608
    %v1214 = vsub.s32 0, %v1213
    %v1215 = vadd.s32 %v1210, 1
    %vm1216 = vcmp.gt.s32.totalorder %v1215, 0
    %v1217 = vsel %vm1216, %v1215, 0
    %v1218 = vshrl.u32 %v1217, 5
    %v1219 = vand.u32 %v1217, 31
    %v1220 = vsub.s32 32, %v1219
    %v1221 = vshrl.u32 683565275, %v1220
    %v1222 = vshll.u32 683565275, %v1219
    %v1223 = vshrl.u32 2475754826, %v1220
    %v1224 = vor.u32 %v1222, %v1223
    %v1225 = vshll.u32 2475754826, %v1219
    %v1226 = vshrl.u32 2131351028, %v1220
    %v1227 = vor.u32 %v1225, %v1226
    %v1228 = vshll.u32 2131351028, %v1219
    %v1229 = vshrl.u32 2102212464, %v1220
    %v1230 = vor.u32 %v1228, %v1229
    %v1231 = vshll.u32 2102212464, %v1219
    %v1232 = vshrl.u32 920167782, %v1220
    %v1233 = vor.u32 %v1231, %v1232
    %v1234 = vshll.u32 920167782, %v1219
    %v1235 = vshrl.u32 1326507024, %v1220
    %v1236 = vor.u32 %v1234, %v1235
    %vm1237 = vcmp.lt.s32.totalorder %v1218, 1
    %vm1238 = vcmp.lt.s32.totalorder %v1218, 2
    %vm1239 = vcmp.lt.s32.totalorder %v1218, 3
    %vm1240 = vcmp.lt.s32.totalorder %v1218, 4
    %v1241 = vsel %vm1237, %v1221, %v1224
    %v1242 = vsel %vm1240, %v1230, 2102212464
    %v1243 = vsel %vm1239, %v1227, %v1242
    %v1244 = vsel %vm1238, %v1241, %v1243
    %v1245 = vsel %vm1237, %v1224, %v1227
    %v1246 = vsel %vm1240, %v1233, 920167782
    %v1247 = vsel %vm1239, %v1230, %v1246
    %v1248 = vsel %vm1238, %v1245, %v1247
    %v1249 = vsel %vm1237, %v1227, %v1230
    %v1250 = vsel %vm1240, %v1236, 1326507024
    %v1251 = vsel %vm1239, %v1233, %v1250
    %v1252 = vsel %vm1238, %v1249, %v1251
    %v1253 = vshll.u32 %v1213, 8
    %v1254 = vmul.u32.u64.compose %v1253, %v1252
    %v1255 = vextract.low.u32 %v1254
    %v1256 = vextract.high.u32 %v1254
    %v1257 = vmul.u32.u64.compose %v1253, %v1248
    %v1258 = vextract.low.u32 %v1257
    %v1259 = vextract.high.u32 %v1257
    %v1260 = vmul.u32 %v1253, %v1244
    %v1261 = vadd.s32 %v1256, %v1258
    %vm1262 = vc.u32 %v1256, %v1258
    %v1263 = vadd.s32 %v1259, 1
    %v1264 = vsel %vm1262, %v1263, %v1259
    %v1265 = vadd.s32 %v1260, %v1264
    %v1266 = vadd.s32 %v1265, 536870912
    %v1267 = vshrl.u32 %v1266, 30
    %v1268 = vshll.u32 %v1267, 30
    %v1269 = vsub.s32 %v1265, %v1268
    %vm1270 = vcmp.lt.s32.totalorder %v1269, 0
    %v1271 = vsub.s32 0, %v1269
    %v1272 = vsel %vm1270, %v1271, %v1269
    %v1273 = vclz %v1272
    %v1274 = vsub.s32 %v1273, 2
    %vm1275 = vcmp.gt.s32.totalorder 0, %v1274
    %v1276 = vsel %vm1275, 0, %v1274
    %v1277 = vsub.s32 32, %v1276
    %v1278 = vshll.u32 %v1269, %v1276
    %v1279 = vshrl.u32 %v1261, %v1277
    %v1280 = vor.u32 %v1278, %v1279
    %v1281 = vsub.s32 4294967266, %v1276
    %v1282 = vadd.s32 %v1281, 127
    %v1283 = vshll.u32 %v1282, 23
    %v1284 = vor.u32 4788187, %v1283
    %v1285 = vand.u32 2147483647, %v1284
    %v1287 = vcvt.s32.f32 %v1280
    %v1288 = vmul.f32 %v1287, %v1285
    %v1289 = vxor.u32 %v1288, 2147483648
    %v1290 = vsel %vm1207, %v1289, %v1288
    %v1291 = vsub.s32 4, %v1267
    %v1292 = vsel %vm1207, %v1291, %v1267
    %v1293 = vsel %vm1206, %v433, %v1290
    %v1294 = vsel %vm1206, 0, %v1292
    %v1295 = vcosq.f32.pop %v1293
    %v1296 = vsinq.f32.pop %v1293
    %vm1297 = vweird.f32 %v433
    %v1298 = vadd.s32 %v1294, 3
    %v1299 = vand.u32 %v1298, 3
    %vm1300 = vcmp.lt.s32.totalorder %v1299, 2
    %vm1301 = vcmp.eq.s32.totalorder %v1299, 0
    %v1302 = vxor.u32 %v1296, 2147483648
    %v1303 = vsel %vm1301, %v1295, %v1302
    %vm1304 = vcmp.eq.s32.totalorder %v1299, 2
    %v1305 = vxor.u32 %v1295, 2147483648
    %v1306 = vsel %vm1304, %v1305, %v1296
    %v1307 = vsel %vm1300, %v1303, %v1306
    %v1308 = vsel %vm1297, nan, %v1307
    %v1309 = vlaneseq
    %v1310 = vshrl.u32 %v1309, 7
    %v1311 = vsub.s32 1, %v1310
    %v1312 = vrot.slane %v435, %v1311
    %v1313 = vlaneseq
    %v1314 = vshrl.u32 %v1313, 7
    %v1315 = vsub.s32 3, %v1314
    %v1316 = vrot.slane %v435, %v1315
    %v1317 = vlaneseq
    %v1318 = vshrl.u32 %v1317, 7
    %v1319 = vsub.s32 5, %v1318
    %v1320 = vrot.slane %v435, %v1319
    %v1321 = vlaneseq
    %v1322 = vshrl.u32 %v1321, 7
    %v1323 = vsub.s32 7, %v1322
    %v1324 = vrot.slane %v435, %v1323
    %v1329 = vlaneseq
    %v1330 = vshrl.u32 %v1329, 7
    %v1331 = vsub.s32 1, %v1330
    %v1332 = vrot.slane %v1312, %v1331
    %v1333 = vlaneseq
    %v1334 = vshrl.u32 %v1333, 7
    %v1335 = vsub.s32 1, %v1334
    %v1336 = vrot.slane %v1316, %v1335
    %v1337 = vlaneseq
    %v1338 = vshrl.u32 %v1337, 7
    %v1339 = vsub.s32 1, %v1338
    %v1340 = vrot.slane %v1320, %v1339
    %v1341 = vlaneseq
    %v1342 = vshrl.u32 %v1341, 7
    %v1343 = vsub.s32 1, %v1342
    %v1344 = vrot.slane %v1324, %v1343
    %v1345 = vadd.f32 %v996, %v1332
    %v1346 = vadd.f32 %v1100, %v1336
    %v1347 = vadd.f32 %v1204, %v1340
    %v1348 = vadd.f32 %v1308, %v1344
    %v1349 = vmul.f32 %v889, %v1345
    %v1350 = vmul.f32 %v890, %v1346
    %v1351 = vmul.f32 %v891, %v1347
    %v1352 = vmul.f32 %v892, %v1348
    %vm1353 = vcmp.gt.f32.partialorder %v1349, 4.0
    %vm1354 = vcmp.gt.f32.partialorder %v1350, 4.0
    %vm1355 = vcmp.gt.f32.partialorder %v1351, 4.0
    %vm1356 = vcmp.gt.f32.partialorder %v1352, 4.0
    %v1357 = vsel %vm1353, 1.0, -1.0
    %v1358 = vsel %vm1354, 1.0, -1.0
    %v1359 = vsel %vm1355, 1.0, -1.0
    %v1360 = vsel %vm1356, 1.0, -1.0
    %1361 = vst [vmem:[#allocation2] sm:$0xff] %v1357
    %1362 = vst [vmem:[#allocation2 + $0x8] sm:$0xff] %v1358
    %1363 = vst [vmem:[#allocation2 + $0x10] sm:$0xff] %v1359
    %1364 = vst [vmem:[#allocation2 + $0x18] sm:$0xff] %v1360
    // Predicated region
    $region22: #{hdc_rbf_encode_batch.1} parent=1 // pred_check
      _
    $region23: #{hdc_rbf_encode_batch.1} parent=1 // pred_check_branch
      %1366 = sbr.rel (0) target = $region25
    $region24: #{hdc_rbf_encode_batch.1} parent=1 // pred_region
      %s1368 = ssub.s32 512, 512
      %1369 = vsyncadd [#allocation3], %s1368
      %s1371 = sshll.u32 [#allocation2], 4
      %s1372 = int_to_ptr.vmem [resolvable:$true] %s1371
      %1374 = dma.vmem_to_hbm [thread:$0]  %s1372, 512, %s5, [#allocation3]
    $region25: #{hdc_rbf_encode_batch.1} parent=1 // pred_fallthru
      _
    // Predicated region
    $region26: #{hdc_rbf_encode_batch.1} parent=1 // pred_check
      _
    $region27: #{hdc_rbf_encode_batch.1} parent=1 // pred_check_branch
      %1376 = sbr.rel (0) target = $region29
    $region28: #{hdc_rbf_encode_batch.1} parent=1 // pred_region
      %1377 = dma.done [#allocation3], 512
    $region29: #{hdc_rbf_encode_batch.1} parent=1 // pred_fallthru
      _
    %1378 = vsyncpa [#allocation3], 1

</llo_original>
